<compile_context>
chip_gen: v7x
topology: tpu7x:2x2x1
jax: 0.10.0
libtpu: 0.0.40
codegen_flags: <defaults>
</compile_context>

<pallas_src>
import functools

import jax
import jax.numpy as jnp
from jax.experimental import pallas as pl
from jax.experimental.pallas import tpu as pltpu

block_size = 8
n_embd = 32
vocab_size = 65     # e.g. tiny-shakespeare char vocab
VPAD = 128          # vocab padded to one full lane width


def _vmem():
    return pl.BlockSpec(memory_space=pltpu.MemorySpace.VMEM)


def _smem():
    return pl.BlockSpec(memory_space=pltpu.MemorySpace.SMEM)


# ---------------------------------------------------------------------------
# Kernels
# ---------------------------------------------------------------------------
def fwd_kernel(idx_ref, tok_ref, pos_ref, w_ref, b_ref, logits_ref, x_ref):
    """logits = (tok[idx] + pos[t]) @ W_pad + b_pad   -> (N, Vp), lane-dense."""
    B, T = idx_ref.shape                       # idx in SMEM, (B, T) int32
    # Embedding gather: dynamic-sublane loads from the token table, plus the
    # positional row, written into the VMEM scratch x_ref (N, E).
    for b in range(B):
        for t in range(T):
            tid = idx_ref[b, t]
            x_ref[pl.ds(b * T + t, 1), :] = (
                tok_ref[pl.ds(tid, 1), :] + pos_ref[pl.ds(t, 1), :])
    logits_ref[...] = (
        jnp.dot(x_ref[...], w_ref[...], preferred_element_type=jnp.float32)
        + b_ref[...])


def fwd_loss_kernel(idx_ref, tgt_ref, tok_ref, pos_ref, w_ref, b_ref,
                    logits_ref, loss_ref, x_ref, *, valid_v):
    """Forward + fused mean cross-entropy epilogue (single launch)."""
    B, T = idx_ref.shape
    N = B * T
    Vp = w_ref.shape[1]
    for b in range(B):
        for t in range(T):
            tid = idx_ref[b, t]
            x_ref[pl.ds(b * T + t, 1), :] = (
                tok_ref[pl.ds(tid, 1), :] + pos_ref[pl.ds(t, 1), :])
    logits = (jnp.dot(x_ref[...], w_ref[...], preferred_element_type=jnp.float32)
              + b_ref[...])
    logits_ref[...] = logits

    # --- cross-entropy over the valid (unpadded) vocab lanes only ---
    iota_v = jax.lax.broadcasted_iota(jnp.int32, (N, Vp), 1)
    valid = iota_v < valid_v
    masked = jnp.where(valid, logits, jnp.float32(-1e30))
    m = jnp.max(masked, axis=-1, keepdims=True)                    # (N, 1)
    lse = jnp.log(jnp.sum(jnp.exp(masked - m), axis=-1, keepdims=True)) + m

    tgt = tgt_ref[...]                                             # (N, 1) int32
    tgt_logit = jnp.sum(jnp.where(iota_v == tgt, logits, 0.0),
                        axis=-1, keepdims=True)                    # (N, 1)

    loss_ref[...] = jnp.sum(lse - tgt_logit, axis=0, keepdims=True) * (1.0 / N)


# ---------------------------------------------------------------------------
# Parameter prep (done ONCE, outside the per-call hot path)
# ---------------------------------------------------------------------------
def prepare_params(params):
    """Pad W -> (E, 128) and b -> (1, 128) once; kernel inputs need no per-call
    XLA ops afterwards."""
    tok_table, pos_table, w, b = params
    V, E = tok_table.shape
    w_pad = jnp.zeros((E, VPAD), jnp.float32).at[:, :V].set(w)
    b_pad = jnp.zeros((1, VPAD), jnp.float32).at[:, :V].set(b)
    return (tok_table.astype(jnp.float32), pos_table.astype(jnp.float32),
            w_pad, b_pad)


# ---------------------------------------------------------------------------
# Wrapper
# ---------------------------------------------------------------------------
def bigram_forward(prepared, idx, targets=None):
    tok_table, pos_table, w_pad, b_pad = prepared
    B, T = idx.shape
    V, E = tok_table.shape
    if T > pos_table.shape[0]:
        raise ValueError(f"T={T} exceeds block_size={pos_table.shape[0]}")
    N = B * T
    Vp = w_pad.shape[1]
    idx_i32 = idx.astype(jnp.int32)

    if targets is None:
        logits_p = pl.pallas_call(
            fwd_kernel,
            out_shape=jax.ShapeDtypeStruct((N, Vp), jnp.float32),
            in_specs=[_smem(), _vmem(), _vmem(), _vmem(), _vmem()],
            out_specs=_vmem(),
            scratch_shapes=[pltpu.VMEM((N, E), jnp.float32)],
        )(idx_i32, tok_table, pos_table, w_pad, b_pad)
        return logits_p[:, :V].reshape(B, T, V), None

    tgt_flat = targets.reshape(N, 1).astype(jnp.int32)
    logits_p, loss = pl.pallas_call(
        functools.partial(fwd_loss_kernel, valid_v=V),
        out_shape=(jax.ShapeDtypeStruct((N, Vp), jnp.float32),
                   jax.ShapeDtypeStruct((1, 1), jnp.float32)),
        in_specs=[_smem(), _vmem(), _vmem(), _vmem(), _vmem(), _vmem()],
        out_specs=(_vmem(), _vmem()),
        scratch_shapes=[pltpu.VMEM((N, E), jnp.float32)],
    )(idx_i32, tgt_flat, tok_table, pos_table, w_pad, b_pad)
    # PyTorch returns logits already reshaped to (B*T, C) when targets given.
    return logits_p[:, :V], loss[0, 0]


# ---------------------------------------------------------------------------
# Deterministic parameter init (shapes from the module's __init__)
# ---------------------------------------------------------------------------
def init_params(key):
    k1, k2, k3, k4 = jax.random.split(key, 4)
    tok_table = jax.random.normal(k1, (vocab_size, n_embd), jnp.float32)
    pos_table = jax.random.normal(k2, (block_size, n_embd), jnp.float32)
    bound = 1.0 / jnp.sqrt(n_embd)
    w = jax.random.uniform(k3, (n_embd, vocab_size), jnp.float32, -bound, bound)
    b = jax.random.uniform(k4, (vocab_size,), jnp.float32, -bound, bound)
    return tok_table, pos_table, w, b


def reference_forward(params, idx, targets=None):
    tok_table, pos_table, w, b = params
    B, T = idx.shape
    tok_emb = tok_table[idx]                       # (B, T, E)
    x = tok_emb + pos_table[:T][None, :, :]
    logits = x @ w + b                             # (B, T, V)
    if targets is None:
        return logits, None
    flat = logits.reshape(B * T, vocab_size)
    tgt = targets.reshape(B * T)
    lse = jax.nn.logsumexp(flat, axis=-1)
    loss = jnp.mean(lse - flat[jnp.arange(B * T), tgt])
    return flat, loss


# ---------------------------------------------------------------------------
if __name__ == "__main__":
    key = jax.random.PRNGKey(0)
    pkey, ikey, tkey = jax.random.split(key, 3)

    params = init_params(pkey)
    prepared = prepare_params(params)      # one-time padding of W / b
    B, T = 2, block_size
    idx = jax.random.randint(ikey, (B, T), 0, vocab_size, jnp.int32)
    targets = jax.random.randint(tkey, (B, T), 0, vocab_size, jnp.int32)

    # targets=None path (PyTorch default)
    logits, loss_none = bigram_forward(prepared, idx, targets=None)
    logits = jax.block_until_ready(logits)
    assert logits.shape == (B, T, vocab_size)
    assert loss_none is None

    # targets path (fused forward + cross-entropy in one launch)
    logits2, loss = bigram_forward(prepared, idx, targets=targets)
    loss = jax.block_until_ready(loss)

    # sanity check against a pure-JAX reference (unpadded params)
    ref_logits_none, _ = reference_forward(params, idx, targets=None)
    ref_logits, ref_loss = reference_forward(params, idx, targets=targets)
    assert jnp.allclose(logits, ref_logits_none, atol=1e-4, rtol=1e-4)
    assert logits2.shape == (B * T, vocab_size)
    assert jnp.allclose(logits2, ref_logits, atol=1e-4, rtol=1e-4)
    assert jnp.allclose(loss, ref_loss, atol=1e-4, rtol=1e-4)

    print("KERNEL_OK")
</pallas_src>

<mosaic_0001>
module attributes {stable_mosaic.version = 11 : i64} {
  func.func @fwd_kernel(%arg0: memref<2x8xi32, #tpu.memory_space<smem>>, %arg1: memref<65x32xf32, #tpu.memory_space<vmem>>, %arg2: memref<8x32xf32, #tpu.memory_space<vmem>>, %arg3: memref<32x128xf32, #tpu.memory_space<vmem>>, %arg4: memref<1x128xf32, #tpu.memory_space<vmem>>, %arg5: memref<16x128xf32, #tpu.memory_space<vmem>>, %arg6: memref<16x32xf32, #tpu.memory_space<vmem>>) attributes {dimension_semantics = [], scalar_prefetch = 0 : i64, scratch_operands = 1 : i64, tpu.core_type = #tpu.core_type<tc>} {
    %c0 = arith.constant 0 : index
    %c0_0 = arith.constant 0 : index
    %0 = memref.load %arg0[%c0, %c0_0] : memref<2x8xi32, #tpu.memory_space<smem>>
    %1 = arith.index_cast %0 : i32 to index
    %c0_1 = arith.constant 0 : index
    %2 = vector.load %arg1[%1, %c0_1] : memref<65x32xf32, #tpu.memory_space<vmem>>, vector<1x32xf32>
    %c0_2 = arith.constant 0 : index
    %c0_3 = arith.constant 0 : index
    %3 = vector.load %arg2[%c0_2, %c0_3] : memref<8x32xf32, #tpu.memory_space<vmem>>, vector<1x32xf32>
    %4 = arith.addf %2, %3 : vector<1x32xf32>
    %c0_4 = arith.constant 0 : index
    %c0_5 = arith.constant 0 : index
    %5 = vector.load %arg6[%c0_4, %c0_5] : memref<16x32xf32, #tpu.memory_space<vmem>>, vector<1x32xf32>
    tpu.vector_store %arg6[%c0_4, %c0_5], %4 {strides = array<i32>} : memref<16x32xf32, #tpu.memory_space<vmem>>, vector<1x32xf32>,
    %c0_6 = arith.constant 0 : index
    %c1 = arith.constant 1 : index
    %6 = memref.load %arg0[%c0_6, %c1] : memref<2x8xi32, #tpu.memory_space<smem>>
    %7 = arith.index_cast %6 : i32 to index
    %c0_7 = arith.constant 0 : index
    %8 = vector.load %arg1[%7, %c0_7] : memref<65x32xf32, #tpu.memory_space<vmem>>, vector<1x32xf32>
    %c1_8 = arith.constant 1 : index
    %c0_9 = arith.constant 0 : index
    %9 = vector.load %arg2[%c1_8, %c0_9] : memref<8x32xf32, #tpu.memory_space<vmem>>, vector<1x32xf32>
    %10 = arith.addf %8, %9 : vector<1x32xf32>
    %c1_10 = arith.constant 1 : index
    %c0_11 = arith.constant 0 : index
    %11 = vector.load %arg6[%c1_10, %c0_11] : memref<16x32xf32, #tpu.memory_space<vmem>>, vector<1x32xf32>
    tpu.vector_store %arg6[%c1_10, %c0_11], %10 {strides = array<i32>} : memref<16x32xf32, #tpu.memory_space<vmem>>, vector<1x32xf32>,
    %c0_12 = arith.constant 0 : index
    %c2 = arith.constant 2 : index
    %12 = memref.load %arg0[%c0_12, %c2] : memref<2x8xi32, #tpu.memory_space<smem>>
    %13 = arith.index_cast %12 : i32 to index
    %c0_13 = arith.constant 0 : index
    %14 = vector.load %arg1[%13, %c0_13] : memref<65x32xf32, #tpu.memory_space<vmem>>, vector<1x32xf32>
    %c2_14 = arith.constant 2 : index
    %c0_15 = arith.constant 0 : index
    %15 = vector.load %arg2[%c2_14, %c0_15] : memref<8x32xf32, #tpu.memory_space<vmem>>, vector<1x32xf32>
    %16 = arith.addf %14, %15 : vector<1x32xf32>
    %c2_16 = arith.constant 2 : index
    %c0_17 = arith.constant 0 : index
    %17 = vector.load %arg6[%c2_16, %c0_17] : memref<16x32xf32, #tpu.memory_space<vmem>>, vector<1x32xf32>
    tpu.vector_store %arg6[%c2_16, %c0_17], %16 {strides = array<i32>} : memref<16x32xf32, #tpu.memory_space<vmem>>, vector<1x32xf32>,
    %c0_18 = arith.constant 0 : index
    %c3 = arith.constant 3 : index
    %18 = memref.load %arg0[%c0_18, %c3] : memref<2x8xi32, #tpu.memory_space<smem>>
    %19 = arith.index_cast %18 : i32 to index
    %c0_19 = arith.constant 0 : index
    %20 = vector.load %arg1[%19, %c0_19] : memref<65x32xf32, #tpu.memory_space<vmem>>, vector<1x32xf32>
    %c3_20 = arith.constant 3 : index
    %c0_21 = arith.constant 0 : index
    %21 = vector.load %arg2[%c3_20, %c0_21] : memref<8x32xf32, #tpu.memory_space<vmem>>, vector<1x32xf32>
    %22 = arith.addf %20, %21 : vector<1x32xf32>
    %c3_22 = arith.constant 3 : index
    %c0_23 = arith.constant 0 : index
    %23 = vector.load %arg6[%c3_22, %c0_23] : memref<16x32xf32, #tpu.memory_space<vmem>>, vector<1x32xf32>
    tpu.vector_store %arg6[%c3_22, %c0_23], %22 {strides = array<i32>} : memref<16x32xf32, #tpu.memory_space<vmem>>, vector<1x32xf32>,
    %c0_24 = arith.constant 0 : index
    %c4 = arith.constant 4 : index
    %24 = memref.load %arg0[%c0_24, %c4] : memref<2x8xi32, #tpu.memory_space<smem>>
    %25 = arith.index_cast %24 : i32 to index
    %c0_25 = arith.constant 0 : index
    %26 = vector.load %arg1[%25, %c0_25] : memref<65x32xf32, #tpu.memory_space<vmem>>, vector<1x32xf32>
    %c4_26 = arith.constant 4 : index
    %c0_27 = arith.constant 0 : index
    %27 = vector.load %arg2[%c4_26, %c0_27] : memref<8x32xf32, #tpu.memory_space<vmem>>, vector<1x32xf32>
    %28 = arith.addf %26, %27 : vector<1x32xf32>
    %c4_28 = arith.constant 4 : index
    %c0_29 = arith.constant 0 : index
    %29 = vector.load %arg6[%c4_28, %c0_29] : memref<16x32xf32, #tpu.memory_space<vmem>>, vector<1x32xf32>
    tpu.vector_store %arg6[%c4_28, %c0_29], %28 {strides = array<i32>} : memref<16x32xf32, #tpu.memory_space<vmem>>, vector<1x32xf32>,
    %c0_30 = arith.constant 0 : index
    %c5 = arith.constant 5 : index
    %30 = memref.load %arg0[%c0_30, %c5] : memref<2x8xi32, #tpu.memory_space<smem>>
    %31 = arith.index_cast %30 : i32 to index
    %c0_31 = arith.constant 0 : index
    %32 = vector.load %arg1[%31, %c0_31] : memref<65x32xf32, #tpu.memory_space<vmem>>, vector<1x32xf32>
    %c5_32 = arith.constant 5 : index
    %c0_33 = arith.constant 0 : index
    %33 = vector.load %arg2[%c5_32, %c0_33] : memref<8x32xf32, #tpu.memory_space<vmem>>, vector<1x32xf32>
    %34 = arith.addf %32, %33 : vector<1x32xf32>
    %c5_34 = arith.constant 5 : index
    %c0_35 = arith.constant 0 : index
    %35 = vector.load %arg6[%c5_34, %c0_35] : memref<16x32xf32, #tpu.memory_space<vmem>>, vector<1x32xf32>
    tpu.vector_store %arg6[%c5_34, %c0_35], %34 {strides = array<i32>} : memref<16x32xf32, #tpu.memory_space<vmem>>, vector<1x32xf32>,
    %c0_36 = arith.constant 0 : index
    %c6 = arith.constant 6 : index
    %36 = memref.load %arg0[%c0_36, %c6] : memref<2x8xi32, #tpu.memory_space<smem>>
    %37 = arith.index_cast %36 : i32 to index
    %c0_37 = arith.constant 0 : index
    %38 = vector.load %arg1[%37, %c0_37] : memref<65x32xf32, #tpu.memory_space<vmem>>, vector<1x32xf32>
    %c6_38 = arith.constant 6 : index
    %c0_39 = arith.constant 0 : index
    %39 = vector.load %arg2[%c6_38, %c0_39] : memref<8x32xf32, #tpu.memory_space<vmem>>, vector<1x32xf32>
    %40 = arith.addf %38, %39 : vector<1x32xf32>
    %c6_40 = arith.constant 6 : index
    %c0_41 = arith.constant 0 : index
    %41 = vector.load %arg6[%c6_40, %c0_41] : memref<16x32xf32, #tpu.memory_space<vmem>>, vector<1x32xf32>
    tpu.vector_store %arg6[%c6_40, %c0_41], %40 {strides = array<i32>} : memref<16x32xf32, #tpu.memory_space<vmem>>, vector<1x32xf32>,
    %c0_42 = arith.constant 0 : index
    %c7 = arith.constant 7 : index
    %42 = memref.load %arg0[%c0_42, %c7] : memref<2x8xi32, #tpu.memory_space<smem>>
    %43 = arith.index_cast %42 : i32 to index
    %c0_43 = arith.constant 0 : index
    %44 = vector.load %arg1[%43, %c0_43] : memref<65x32xf32, #tpu.memory_space<vmem>>, vector<1x32xf32>
    %c7_44 = arith.constant 7 : index
    %c0_45 = arith.constant 0 : index
    %45 = vector.load %arg2[%c7_44, %c0_45] : memref<8x32xf32, #tpu.memory_space<vmem>>, vector<1x32xf32>
    %46 = arith.addf %44, %45 : vector<1x32xf32>
    %c7_46 = arith.constant 7 : index
    %c0_47 = arith.constant 0 : index
    %47 = vector.load %arg6[%c7_46, %c0_47] : memref<16x32xf32, #tpu.memory_space<vmem>>, vector<1x32xf32>
    tpu.vector_store %arg6[%c7_46, %c0_47], %46 {strides = array<i32>} : memref<16x32xf32, #tpu.memory_space<vmem>>, vector<1x32xf32>,
    %c1_48 = arith.constant 1 : index
    %c0_49 = arith.constant 0 : index
    %48 = memref.load %arg0[%c1_48, %c0_49] : memref<2x8xi32, #tpu.memory_space<smem>>
    %49 = arith.index_cast %48 : i32 to index
    %c0_50 = arith.constant 0 : index
    %50 = vector.load %arg1[%49, %c0_50] : memref<65x32xf32, #tpu.memory_space<vmem>>, vector<1x32xf32>
    %c0_51 = arith.constant 0 : index
    %c0_52 = arith.constant 0 : index
    %51 = vector.load %arg2[%c0_51, %c0_52] : memref<8x32xf32, #tpu.memory_space<vmem>>, vector<1x32xf32>
    %52 = arith.addf %50, %51 : vector<1x32xf32>
    %c8 = arith.constant 8 : index
    %c0_53 = arith.constant 0 : index
    %53 = vector.load %arg6[%c8, %c0_53] : memref<16x32xf32, #tpu.memory_space<vmem>>, vector<1x32xf32>
    tpu.vector_store %arg6[%c8, %c0_53], %52 {strides = array<i32>} : memref<16x32xf32, #tpu.memory_space<vmem>>, vector<1x32xf32>,
    %c1_54 = arith.constant 1 : index
    %c1_55 = arith.constant 1 : index
    %54 = memref.load %arg0[%c1_54, %c1_55] : memref<2x8xi32, #tpu.memory_space<smem>>
    %55 = arith.index_cast %54 : i32 to index
    %c0_56 = arith.constant 0 : index
    %56 = vector.load %arg1[%55, %c0_56] : memref<65x32xf32, #tpu.memory_space<vmem>>, vector<1x32xf32>
    %c1_57 = arith.constant 1 : index
    %c0_58 = arith.constant 0 : index
    %57 = vector.load %arg2[%c1_57, %c0_58] : memref<8x32xf32, #tpu.memory_space<vmem>>, vector<1x32xf32>
    %58 = arith.addf %56, %57 : vector<1x32xf32>
    %c9 = arith.constant 9 : index
    %c0_59 = arith.constant 0 : index
    %59 = vector.load %arg6[%c9, %c0_59] : memref<16x32xf32, #tpu.memory_space<vmem>>, vector<1x32xf32>
    tpu.vector_store %arg6[%c9, %c0_59], %58 {strides = array<i32>} : memref<16x32xf32, #tpu.memory_space<vmem>>, vector<1x32xf32>,
    %c1_60 = arith.constant 1 : index
    %c2_61 = arith.constant 2 : index
    %60 = memref.load %arg0[%c1_60, %c2_61] : memref<2x8xi32, #tpu.memory_space<smem>>
    %61 = arith.index_cast %60 : i32 to index
    %c0_62 = arith.constant 0 : index
    %62 = vector.load %arg1[%61, %c0_62] : memref<65x32xf32, #tpu.memory_space<vmem>>, vector<1x32xf32>
    %c2_63 = arith.constant 2 : index
    %c0_64 = arith.constant 0 : index
    %63 = vector.load %arg2[%c2_63, %c0_64] : memref<8x32xf32, #tpu.memory_space<vmem>>, vector<1x32xf32>
    %64 = arith.addf %62, %63 : vector<1x32xf32>
    %c10 = arith.constant 10 : index
    %c0_65 = arith.constant 0 : index
    %65 = vector.load %arg6[%c10, %c0_65] : memref<16x32xf32, #tpu.memory_space<vmem>>, vector<1x32xf32>
    tpu.vector_store %arg6[%c10, %c0_65], %64 {strides = array<i32>} : memref<16x32xf32, #tpu.memory_space<vmem>>, vector<1x32xf32>,
    %c1_66 = arith.constant 1 : index
    %c3_67 = arith.constant 3 : index
    %66 = memref.load %arg0[%c1_66, %c3_67] : memref<2x8xi32, #tpu.memory_space<smem>>
    %67 = arith.index_cast %66 : i32 to index
    %c0_68 = arith.constant 0 : index
    %68 = vector.load %arg1[%67, %c0_68] : memref<65x32xf32, #tpu.memory_space<vmem>>, vector<1x32xf32>
    %c3_69 = arith.constant 3 : index
    %c0_70 = arith.constant 0 : index
    %69 = vector.load %arg2[%c3_69, %c0_70] : memref<8x32xf32, #tpu.memory_space<vmem>>, vector<1x32xf32>
    %70 = arith.addf %68, %69 : vector<1x32xf32>
    %c11 = arith.constant 11 : index
    %c0_71 = arith.constant 0 : index
    %71 = vector.load %arg6[%c11, %c0_71] : memref<16x32xf32, #tpu.memory_space<vmem>>, vector<1x32xf32>
    tpu.vector_store %arg6[%c11, %c0_71], %70 {strides = array<i32>} : memref<16x32xf32, #tpu.memory_space<vmem>>, vector<1x32xf32>,
    %c1_72 = arith.constant 1 : index
    %c4_73 = arith.constant 4 : index
    %72 = memref.load %arg0[%c1_72, %c4_73] : memref<2x8xi32, #tpu.memory_space<smem>>
    %73 = arith.index_cast %72 : i32 to index
    %c0_74 = arith.constant 0 : index
    %74 = vector.load %arg1[%73, %c0_74] : memref<65x32xf32, #tpu.memory_space<vmem>>, vector<1x32xf32>
    %c4_75 = arith.constant 4 : index
    %c0_76 = arith.constant 0 : index
    %75 = vector.load %arg2[%c4_75, %c0_76] : memref<8x32xf32, #tpu.memory_space<vmem>>, vector<1x32xf32>
    %76 = arith.addf %74, %75 : vector<1x32xf32>
    %c12 = arith.constant 12 : index
    %c0_77 = arith.constant 0 : index
    %77 = vector.load %arg6[%c12, %c0_77] : memref<16x32xf32, #tpu.memory_space<vmem>>, vector<1x32xf32>
    tpu.vector_store %arg6[%c12, %c0_77], %76 {strides = array<i32>} : memref<16x32xf32, #tpu.memory_space<vmem>>, vector<1x32xf32>,
    %c1_78 = arith.constant 1 : index
    %c5_79 = arith.constant 5 : index
    %78 = memref.load %arg0[%c1_78, %c5_79] : memref<2x8xi32, #tpu.memory_space<smem>>
    %79 = arith.index_cast %78 : i32 to index
    %c0_80 = arith.constant 0 : index
    %80 = vector.load %arg1[%79, %c0_80] : memref<65x32xf32, #tpu.memory_space<vmem>>, vector<1x32xf32>
    %c5_81 = arith.constant 5 : index
    %c0_82 = arith.constant 0 : index
    %81 = vector.load %arg2[%c5_81, %c0_82] : memref<8x32xf32, #tpu.memory_space<vmem>>, vector<1x32xf32>
    %82 = arith.addf %80, %81 : vector<1x32xf32>
    %c13 = arith.constant 13 : index
    %c0_83 = arith.constant 0 : index
    %83 = vector.load %arg6[%c13, %c0_83] : memref<16x32xf32, #tpu.memory_space<vmem>>, vector<1x32xf32>
    tpu.vector_store %arg6[%c13, %c0_83], %82 {strides = array<i32>} : memref<16x32xf32, #tpu.memory_space<vmem>>, vector<1x32xf32>,
    %c1_84 = arith.constant 1 : index
    %c6_85 = arith.constant 6 : index
    %84 = memref.load %arg0[%c1_84, %c6_85] : memref<2x8xi32, #tpu.memory_space<smem>>
    %85 = arith.index_cast %84 : i32 to index
    %c0_86 = arith.constant 0 : index
    %86 = vector.load %arg1[%85, %c0_86] : memref<65x32xf32, #tpu.memory_space<vmem>>, vector<1x32xf32>
    %c6_87 = arith.constant 6 : index
    %c0_88 = arith.constant 0 : index
    %87 = vector.load %arg2[%c6_87, %c0_88] : memref<8x32xf32, #tpu.memory_space<vmem>>, vector<1x32xf32>
    %88 = arith.addf %86, %87 : vector<1x32xf32>
    %c14 = arith.constant 14 : index
    %c0_89 = arith.constant 0 : index
    %89 = vector.load %arg6[%c14, %c0_89] : memref<16x32xf32, #tpu.memory_space<vmem>>, vector<1x32xf32>
    tpu.vector_store %arg6[%c14, %c0_89], %88 {strides = array<i32>} : memref<16x32xf32, #tpu.memory_space<vmem>>, vector<1x32xf32>,
    %c1_90 = arith.constant 1 : index
    %c7_91 = arith.constant 7 : index
    %90 = memref.load %arg0[%c1_90, %c7_91] : memref<2x8xi32, #tpu.memory_space<smem>>
    %91 = arith.index_cast %90 : i32 to index
    %c0_92 = arith.constant 0 : index
    %92 = vector.load %arg1[%91, %c0_92] : memref<65x32xf32, #tpu.memory_space<vmem>>, vector<1x32xf32>
    %c7_93 = arith.constant 7 : index
    %c0_94 = arith.constant 0 : index
    %93 = vector.load %arg2[%c7_93, %c0_94] : memref<8x32xf32, #tpu.memory_space<vmem>>, vector<1x32xf32>
    %94 = arith.addf %92, %93 : vector<1x32xf32>
    %c15 = arith.constant 15 : index
    %c0_95 = arith.constant 0 : index
    %95 = vector.load %arg6[%c15, %c0_95] : memref<16x32xf32, #tpu.memory_space<vmem>>, vector<1x32xf32>
    tpu.vector_store %arg6[%c15, %c0_95], %94 {strides = array<i32>} : memref<16x32xf32, #tpu.memory_space<vmem>>, vector<1x32xf32>,
    %c0_96 = arith.constant 0 : index
    %c0_97 = arith.constant 0 : index
    %96 = vector.load %arg6[%c0_96, %c0_97] : memref<16x32xf32, #tpu.memory_space<vmem>>, vector<16x32xf32>
    %c0_98 = arith.constant 0 : index
    %c0_99 = arith.constant 0 : index
    %97 = vector.load %arg3[%c0_98, %c0_99] : memref<32x128xf32, #tpu.memory_space<vmem>>, vector<32x128xf32>
    %cst = arith.constant dense<0.000000e+00> : vector<16x128xf32>
    %98 = tpu.matmul %96, %97, %cst {dimension_numbers = #tpu.dot_dimension_numbers<[1], [0], [0], [1], [0, 0, 1, 1], [], []>} : vector<16x32xf32>, vector<32x128xf32>, vector<16x128xf32> -> vector<16x128xf32>
    %c0_100 = arith.constant 0 : index
    %c0_101 = arith.constant 0 : index
    %99 = vector.load %arg4[%c0_100, %c0_101] : memref<1x128xf32, #tpu.memory_space<vmem>>, vector<1x128xf32>
    %100 = vector.broadcast %99 : vector<1x128xf32> to vector<16x128xf32>
    %101 = arith.addf %98, %100 : vector<16x128xf32>
    %c0_102 = arith.constant 0 : index
    %c0_103 = arith.constant 0 : index
    %102 = vector.load %arg5[%c0_102, %c0_103] : memref<16x128xf32, #tpu.memory_space<vmem>>, vector<16x128xf32>
    tpu.vector_store %arg5[%c0_102, %c0_103], %101 {strides = array<i32>} : memref<16x128xf32, #tpu.memory_space<vmem>>, vector<16x128xf32>,
    return
  }
}

</mosaic_0001>

<llo_original>
// kernel: tpu_custom_call.1
$region0: #{tpu_custom_call.1}
  #allocation0 [shape = 'u32[]', space=smem, size = 0x4, offset = 0x4, fixed_abs, tag = 'smem constant byte address 0x4 - core index']
  #allocation1 [shape = 'u32[144,128]{1,0:T(1,128)}', space=vmem, size = 0x12000, scoped, tag = 'internal scratch']
  #allocation2 [shape = 'f32[16,32]{1,0:T(8,128)}', space=vmem, size = 0x2000, scoped, tag = 'scratch operand']
  %s0 = inlined_call_operand.vmem [shape: s32[2,8], index: 0, kind: input, shape index: {}]
  %s1 = inlined_call_operand.vmem [shape: f32[65,32], index: 1, kind: input, shape index: {}]
  %s2 = inlined_call_operand.vmem [shape: f32[8,32], index: 2, kind: input, shape index: {}]
  %s3 = inlined_call_operand.vmem [shape: f32[32,128], index: 3, kind: input, shape index: {}]
  %s4 = inlined_call_operand.vmem [shape: f32[1,128], index: 4, kind: input, shape index: {}]
  %s5 = inlined_call_operand.hbm [shape: f32[16,128], index: 5, kind: output, shape index: {}]
  %s6 = sld [smem:[#allocation0]]
  $region34: #{tpu_custom_call.1} parent=0
    _
  %s8 = ssub.s32 1, %s6
  %s9 = scalar_select 0, %s8, %s6
  $region1: #{tpu_custom_call.1} parent=0
    #allocation3 [shape = 'u8[1024]{0}', space=smem, size = 0x400, scoped, tag = 'input window, operand 0, single buffered']
    #allocation4 [shape = 's32[1]{0}', space=sflag, size = 0x4, scoped, tag = 'scoped memory for tpu_custom_call.1']
    #allocation5 [shape = 's32[1]{0}', space=sflag, size = 0x4, scoped, tag = 'scoped memory for tpu_custom_call.1']
    #allocation6 [shape = 'u8[8192]{0}', space=vmem, size = 0x2000, scoped, tag = 'output window, operand 0, single buffered']
    %10 = vsyncpa [#allocation5], 0
    %11 = vsyncpa [#allocation4], 0
    // Predicated region
    $region2: #{tpu_custom_call.1} parent=1 // pred_check
      _
    $region3: #{tpu_custom_call.1} parent=1 // pred_check_branch
      %13 = sbr.rel (0) target = $region5
    $region4: #{tpu_custom_call.1} parent=1 // pred_region
      %s15 = ssub.s32 32, 32
      %16 = vsyncadd [#allocation5], %s15
      %s18 = sshll.u32 %s0, 4
      %s19 = int_to_ptr.vmem [resolvable:$true] %s18
      %21 = dma.vmem_to_smem %s19, 32, [#allocation3], [#allocation5]
    $region5: #{tpu_custom_call.1} parent=1 // pred_fallthru
      _
    // Predicated region
    $region6: #{tpu_custom_call.1} parent=1 // pred_check
      _
    $region7: #{tpu_custom_call.1} parent=1 // pred_check_branch
      %23 = sbr.rel (0) target = $region9
    $region8: #{tpu_custom_call.1} parent=1 // pred_region
      _
    $region9: #{tpu_custom_call.1} parent=1 // pred_fallthru
      _
    // Predicated region
    $region10: #{tpu_custom_call.1} parent=1 // pred_check
      _
    $region11: #{tpu_custom_call.1} parent=1 // pred_check_branch
      %25 = sbr.rel (0) target = $region13
    $region12: #{tpu_custom_call.1} parent=1 // pred_region
      _
    $region13: #{tpu_custom_call.1} parent=1 // pred_fallthru
      _
    // Predicated region
    $region14: #{tpu_custom_call.1} parent=1 // pred_check
      _
    $region15: #{tpu_custom_call.1} parent=1 // pred_check_branch
      %27 = sbr.rel (0) target = $region17
    $region16: #{tpu_custom_call.1} parent=1 // pred_region
      _
    $region17: #{tpu_custom_call.1} parent=1 // pred_fallthru
      _
    // Predicated region
    $region18: #{tpu_custom_call.1} parent=1 // pred_check
      _
    $region19: #{tpu_custom_call.1} parent=1 // pred_check_branch
      %29 = sbr.rel (0) target = $region21
    $region20: #{tpu_custom_call.1} parent=1 // pred_region
      _
    $region21: #{tpu_custom_call.1} parent=1 // pred_fallthru
      _
    // Predicated region
    $region22: #{tpu_custom_call.1} parent=1 // pred_check
      _
    $region23: #{tpu_custom_call.1} parent=1 // pred_check_branch
      %31 = sbr.rel (0) target = $region25
    $region24: #{tpu_custom_call.1} parent=1 // pred_region
      %32 = dma.done [#allocation5], 32
    $region25: #{tpu_custom_call.1} parent=1 // pred_fallthru
      _
    %33 = sfence
    %s34 = sld [smem:[#allocation3]]
    %s35 = scalar_lea.vmem %s1, %s34
    %v36 = vld [vmem:[%s35] sm:$0x1]
    %v37 = vld [vmem:[%s2] sm:$0x1]
    %v38 = vadd.f32 %v36, %v37
    %vm39 = vcmask 253952
    %40 = vst.msk [vmem:[#allocation2] sm:$0x1] %vm39, %v38
    %s41 = sld [smem:[#allocation3 + $0x1]]
    %s42 = scalar_lea.vmem %s1, %s41
    %v43 = vld [vmem:[%s42] sm:$0x1]
    %v44 = vld [vmem:[%s2 + $0x1] sm:$0x1]
    %v45 = vadd.f32 %v43, %v44
    %46 = vst.msk [vmem:[#allocation2 + $0x1] sm:$0x1] %vm39, %v45
    %s47 = sld [smem:[#allocation3 + $0x2]]
    %s48 = scalar_lea.vmem %s1, %s47
    %v49 = vld [vmem:[%s48] sm:$0x1]
    %v50 = vld [vmem:[%s2 + $0x2] sm:$0x1]
    %v51 = vadd.f32 %v49, %v50
    %52 = vst.msk [vmem:[#allocation2 + $0x2] sm:$0x1] %vm39, %v51
    %s53 = sld [smem:[#allocation3 + $0x3]]
    %s54 = scalar_lea.vmem %s1, %s53
    %v55 = vld [vmem:[%s54] sm:$0x1]
    %v56 = vld [vmem:[%s2 + $0x3] sm:$0x1]
    %v57 = vadd.f32 %v55, %v56
    %58 = vst.msk [vmem:[#allocation2 + $0x3] sm:$0x1] %vm39, %v57
    %s59 = sld [smem:[#allocation3 + $0x4]]
    %s60 = scalar_lea.vmem %s1, %s59
    %v61 = vld [vmem:[%s60] sm:$0x1]
    %v62 = vld [vmem:[%s2 + $0x4] sm:$0x1]
    %v63 = vadd.f32 %v61, %v62
    %64 = vst.msk [vmem:[#allocation2 + $0x4] sm:$0x1] %vm39, %v63
    %s65 = sld [smem:[#allocation3 + $0x5]]
    %s66 = scalar_lea.vmem %s1, %s65
    %v67 = vld [vmem:[%s66] sm:$0x1]
    %v68 = vld [vmem:[%s2 + $0x5] sm:$0x1]
    %v69 = vadd.f32 %v67, %v68
    %70 = vst.msk [vmem:[#allocation2 + $0x5] sm:$0x1] %vm39, %v69
    %s71 = sld [smem:[#allocation3 + $0x6]]
    %s72 = scalar_lea.vmem %s1, %s71
    %v73 = vld [vmem:[%s72] sm:$0x1]
    %v74 = vld [vmem:[%s2 + $0x6] sm:$0x1]
    %v75 = vadd.f32 %v73, %v74
    %76 = vst.msk [vmem:[#allocation2 + $0x6] sm:$0x1] %vm39, %v75
    %s77 = sld [smem:[#allocation3 + $0x7]]
    %s78 = scalar_lea.vmem %s1, %s77
    %v79 = vld [vmem:[%s78] sm:$0x1]
    %v80 = vld [vmem:[%s2 + $0x7] sm:$0x1]
    %v81 = vadd.f32 %v79, %v80
    %82 = vst.msk [vmem:[#allocation2 + $0x7] sm:$0x1] %vm39, %v81
    %s83 = sld [smem:[#allocation3 + $0x80]]
    %s84 = scalar_lea.vmem %s1, %s83
    %v85 = vld [vmem:[%s84] sm:$0x1]
    %v86 = vld [vmem:[%s2] sm:$0x1]
    %v87 = vadd.f32 %v85, %v86
    %88 = vst.msk [vmem:[#allocation2 + $0x8] sm:$0x1] %vm39, %v87
    %s89 = sld [smem:[#allocation3 + $0x81]]
    %s90 = scalar_lea.vmem %s1, %s89
    %v91 = vld [vmem:[%s90] sm:$0x1]
    %v92 = vld [vmem:[%s2 + $0x1] sm:$0x1]
    %v93 = vadd.f32 %v91, %v92
    %94 = vst.msk [vmem:[#allocation2 + $0x9] sm:$0x1] %vm39, %v93
    %s95 = sld [smem:[#allocation3 + $0x82]]
    %s96 = scalar_lea.vmem %s1, %s95
    %v97 = vld [vmem:[%s96] sm:$0x1]
    %v98 = vld [vmem:[%s2 + $0x2] sm:$0x1]
    %v99 = vadd.f32 %v97, %v98
    %100 = vst.msk [vmem:[#allocation2 + $0xa] sm:$0x1] %vm39, %v99
    %s101 = sld [smem:[#allocation3 + $0x83]]
    %s102 = scalar_lea.vmem %s1, %s101
    %v103 = vld [vmem:[%s102] sm:$0x1]
    %v104 = vld [vmem:[%s2 + $0x3] sm:$0x1]
    %v105 = vadd.f32 %v103, %v104
    %106 = vst.msk [vmem:[#allocation2 + $0xb] sm:$0x1] %vm39, %v105
    %s107 = sld [smem:[#allocation3 + $0x84]]
    %s108 = scalar_lea.vmem %s1, %s107
    %v109 = vld [vmem:[%s108] sm:$0x1]
    %v110 = vld [vmem:[%s2 + $0x4] sm:$0x1]
    %v111 = vadd.f32 %v109, %v110
    %112 = vst.msk [vmem:[#allocation2 + $0xc] sm:$0x1] %vm39, %v111
    %s113 = sld [smem:[#allocation3 + $0x85]]
    %s114 = scalar_lea.vmem %s1, %s113
    %v115 = vld [vmem:[%s114] sm:$0x1]
    %v116 = vld [vmem:[%s2 + $0x5] sm:$0x1]
    %v117 = vadd.f32 %v115, %v116
    %118 = vst.msk [vmem:[#allocation2 + $0xd] sm:$0x1] %vm39, %v117
    %s119 = sld [smem:[#allocation3 + $0x86]]
    %s120 = scalar_lea.vmem %s1, %s119
    %v121 = vld [vmem:[%s120] sm:$0x1]
    %v122 = vld [vmem:[%s2 + $0x6] sm:$0x1]
    %v123 = vadd.f32 %v121, %v122
    %124 = vst.msk [vmem:[#allocation2 + $0xe] sm:$0x1] %vm39, %v123
    %s125 = sld [smem:[#allocation3 + $0x87]]
    %s126 = scalar_lea.vmem %s1, %s125
    %v127 = vld [vmem:[%s126] sm:$0x1]
    %v128 = vld [vmem:[%s2 + $0x7] sm:$0x1]
    %v129 = vadd.f32 %v127, %v128
    %130 = vst.msk [vmem:[#allocation2 + $0xf] sm:$0x1] %vm39, %v129
    %v131 = vld [vmem:[#allocation2] sm:$0xff]
    %v132 = vld [vmem:[#allocation2 + $0x8] sm:$0xff]
    %v133 = vld [vmem:[%s3] sm:$0xff]
    %v134 = vld [vmem:[%s3 + $0x8] sm:$0xff]
    %v135 = vld [vmem:[%s3 + $0x10] sm:$0xff]
    %v136 = vld [vmem:[%s3 + $0x18] sm:$0xff]
    %v137 = vld [vmem:[%s4] sm:$0x1]
    %v139 = vlaneseq
    %v140 = vshrl.u32 %v139, 7
    %v141 = vsub.s32 0, %v140
    %v142 = vrot.slane %v137, %v141
    %vm144 = vcmask 261120
    %v146 = vsel %vm144, %v131, 0
    %v149 = vsel %vm144, %v132, 0
    %151 = vmatprep.subr.mxu0 0.0
    %152 = vmatpush1.msra.mxu0 %v133
    %153 = vmatprep.subr.mxu0 0.0
    %154 = vmatpush1.msra.mxu0 %v134
    %155 = vmatprep.subr.mxu0 0.0
    %156 = vmatpush1.msra.mxu0 %v135
    %157 = vmatprep.subr.mxu0 0.0
    %158 = vmatpush1.msra.mxu0 %v136
    %159 = vmatprep.subr.mxu0 0.0
    %160 = vmatpush1.msra.mxu0 0.0
    %161 = vmatprep.subr.mxu0 0.0
    %162 = vmatpush1.msra.mxu0 0.0
    %163 = vmatprep.subr.mxu0 0.0
    %164 = vmatpush1.msra.mxu0 0.0
    %165 = vmatprep.subr.mxu0 0.0
    %166 = vmatpush1.msra.mxu0 0.0
    %167 = vmatprep.subr.mxu0 0.0
    %168 = vmatpush1.msra.mxu0 0.0
    %169 = vmatprep.subr.mxu0 0.0
    %170 = vmatpush1.msra.mxu0 0.0
    %171 = vmatprep.subr.mxu0 0.0
    %172 = vmatpush1.msra.mxu0 0.0
    %173 = vmatprep.subr.mxu0 0.0
    %174 = vmatpush1.msra.mxu0 0.0
    %175 = vmatprep.subr.mxu0 0.0
    %176 = vmatpush1.msra.mxu0 0.0
    %177 = vmatprep.subr.mxu0 0.0
    %178 = vmatpush1.msra.mxu0 0.0
    %179 = vmatprep.subr.mxu0 0.0
    %180 = vmatpush1.msra.mxu0 0.0
    %181 = vmatprep.subr.mxu0 0.0
    %182 = vmatpush1.msra.mxu0 0.0
    %183 = vmatprep.subr.mxu0 0.0
    %184 = vmatpush1.msra.mxu0 0.0
    %185 = vmatprep.subr.mxu0 0.0
    %186 = vmatpush1.msra.mxu0 0.0
    %187 = vmatprep.subr.mxu0 0.0
    %188 = vmatpush1.msra.mxu0 0.0
    %189 = vmatprep.subr.mxu0 0.0
    %190 = vmatpush1.msra.mxu0 0.0
    %191 = vmatprep.subr.mxu0 0.0
    %192 = vmatpush1.msra.mxu0 0.0
    %193 = vmatprep.subr.mxu0 0.0
    %194 = vmatpush1.msra.mxu0 0.0
    %195 = vmatprep.subr.mxu0 0.0
    %196 = vmatpush1.msra.mxu0 0.0
    %197 = vmatprep.subr.mxu0 0.0
    %198 = vmatpush1.msra.mxu0 0.0
    %199 = vmatprep.subr.mxu0 0.0
    %200 = vmatpush1.msra.mxu0 0.0
    %201 = vmatprep.subr.mxu0 0.0
    %202 = vmatpush1.msra.mxu0 0.0
    %203 = vmatprep.subr.mxu0 0.0
    %204 = vmatpush1.msra.mxu0 0.0
    %205 = vmatprep.subr.mxu0 0.0
    %206 = vmatpush1.msra.mxu0 0.0
    %207 = vmatprep.subr.mxu0 0.0
    %208 = vmatpush1.msra.mxu0 0.0
    %209 = vmatprep.subr.mxu0 0.0
    %210 = vmatpush1.msra.mxu0 0.0
    %211 = vmatprep.subr.mxu0 0.0
    %212 = vmatpush1.msra.mxu0 0.0
    %213 = vmatprep.subr.mxu0 0.0
    %214 = vmatpush1.msra.mxu0 0.0
    %215 = vmatprep.mubr.f32.mxu0 0.0
    %216 = vmatmul.mubr.f32.gmra.mrb[0].mxu0 %v146
    %v217 = vpop.f32.mrb[0].mxu0
    %v218 = vadd.f32 %v142, %v217
    %v219 = vpop.f32.mrb[0].mxu0
    %220 = vmatprep.mubr.f32.mxu0 0.0
    %221 = vmatmul.mubr.f32.gmra.mrb[0].mxu0 %v149
    %v222 = vpop.f32.mrb[0].mxu0
    %v223 = vadd.f32 %v142, %v222
    %v224 = vpop.f32.mrb[0].mxu0
    %225 = vdwg.mxu0
    %226 = vst [vmem:[#allocation6] sm:$0xff] %v218
    %227 = vst [vmem:[#allocation6 + $0x8] sm:$0xff] %v223
    // Predicated region
    $region26: #{tpu_custom_call.1} parent=1 // pred_check
      _
    $region27: #{tpu_custom_call.1} parent=1 // pred_check_branch
      %229 = sbr.rel (0) target = $region29
    $region28: #{tpu_custom_call.1} parent=1 // pred_region
      %s231 = ssub.s32 256, 256
      %232 = vsyncadd [#allocation4], %s231
      %s233 = sshll.u32 [#allocation6], 4
      %s234 = int_to_ptr.vmem [resolvable:$true] %s233
      %239 = dma.vmem_to_hbm [thread:$0]  %s234, 256, %s5, [#allocation4], 128, 128, 8
    $region29: #{tpu_custom_call.1} parent=1 // pred_fallthru
      _
    // Predicated region
    $region30: #{tpu_custom_call.1} parent=1 // pred_check
      _
    $region31: #{tpu_custom_call.1} parent=1 // pred_check_branch
      %241 = sbr.rel (0) target = $region33
    $region32: #{tpu_custom_call.1} parent=1 // pred_region
      %242 = dma.done [#allocation4], 256
    $region33: #{tpu_custom_call.1} parent=1 // pred_fallthru
      _
    %243 = vsyncpa [#allocation4], 1
    %244 = vsyncpa [#allocation5], 1

</llo_original>
